<compile_context>
chip_gen: v6e
topology: v6e:2x2x1
jax: 0.10.0
libtpu: 0.0.40
codegen_flags: <defaults>
</compile_context>

<pallas_src>
import jax
import jax.numpy as jnp
from jax import lax
from jax.experimental import pallas as pl
from jax.experimental.pallas import tpu as pltpu


# ----------------------------------------------------------------------------
# Small helpers
# ----------------------------------------------------------------------------
def _divmod_const(x, d):
    """divmod of a nonnegative int32 vector by a positive Python int."""
    if d & (d - 1) == 0:                          # power of two -> shift / and
        sh = d.bit_length() - 1
        return x >> sh, x & (d - 1)
    # NOTE: vector int32 division lowers to a multi-op sequence in Mosaic; it
    # only runs on frame-0 tiles (gated with pl.when below).
    q = x // d
    return q, x - q * d


def _choose_tile(hw, cap=32768):
    """Pixel-tile size that divides H*W exactly (no padding, no per-step
    validity mask) and is lane-aligned when smaller than a full frame."""
    if hw <= cap:
        return hw                                  # one full frame per step
    for t in range(cap, 0, -1):
        if hw % t == 0 and t % 128 == 0:
            return t
    # TODO(synk): pad the pixel axis for pathological H*W with no lane-aligned
    # divisor <= cap; not needed for the shapes exercised here.
    return hw


# ----------------------------------------------------------------------------
# Fused kernel: box-prompt channel + per-pixel MLP + binary-Jaccard partials
# ----------------------------------------------------------------------------
def fused_segmentation_jaccard(bbox, x3, gt3, params, *, W, tile_hw):
    """bbox: (4,) int32 [min_x, min_y, max_x, max_y];
    x3:  (S, 3, H*W) f32 rgb in natural contiguous layout;
    gt3: (S, 1, H*W) f32 ground-truth masks.
    Returns per-frame (intersection, union) partial sums, each (S, 1, 1) f32."""
    S, C, HW = x3.shape
    hidden = params["w1_rgb"].shape[0]
    assert HW % tile_hw == 0
    n_tiles = HW // tile_hw

    def kernel(bbox_ref, x_ref, gt_ref, w1_ref, w1m_ref, b1_ref, w2t_ref,
               b2_ref, inter_ref, union_ref, h_ref):
        s = pl.program_id(0)          # frame index
        j = pl.program_id(1)          # pixel tile within the frame

        @pl.when(j == 0)
        def _():
            inter_ref[...] = jnp.zeros_like(inter_ref)
            union_ref[...] = jnp.zeros_like(union_ref)

        # Layer 1 on the MXU: (hidden, 3) @ (3, tile) -> (hidden, tile).
        h_ref[...] = (jnp.dot(w1_ref[...], x_ref[0],
                              preferred_element_type=jnp.float32)
                      + b1_ref[...])

        # MobileSAM stand-in: box-prompt channel, frame 0 only (gated so the
        # iota / div-mod / compares / FMA are skipped on the other frames).
        @pl.when(s == 0)
        def _():
            pix = j * tile_hw + lax.broadcasted_iota(jnp.int32, (1, tile_hw), 1)
            row, col = _divmod_const(pix, W)
            in_box = ((col >= bbox_ref[0]) & (col <= bbox_ref[2])
                      & (row >= bbox_ref[1]) & (row <= bbox_ref[3]))
            h_ref[...] += w1m_ref[...] * in_box.astype(jnp.float32)

        h = jnp.maximum(h_ref[...], 0.0)                        # ReLU

        # Layer 2 on the MXU: (1, hidden) @ (hidden, tile) -> (1, tile).
        logit = (jnp.dot(w2t_ref[...], h, preferred_element_type=jnp.float32)
                 + b2_ref[...])

        # sigmoid(logit) >= 0.5  <=>  logit >= 0   (sigmoid eliminated)
        pred = logit >= 0.0
        targ = gt_ref[0] >= 0.5
        inter_ref[...] += jnp.sum((pred & targ).astype(jnp.float32))
        union_ref[...] += jnp.sum((pred | targ).astype(jnp.float32))

    # TODO(synk): on v6e/v7x, casting x3 / the weights to bfloat16 (f32 accum)
    # would halve HBM traffic and double MXU throughput; kept f32 so the same
    # kernel runs bit-faithfully on v5e as well.
    return pl.pallas_call(
        kernel,
        out_shape=(jax.ShapeDtypeStruct((S, 1, 1), jnp.float32),
                   jax.ShapeDtypeStruct((S, 1, 1), jnp.float32)),
        grid_spec=pltpu.PrefetchScalarGridSpec(
            num_scalar_prefetch=1,
            grid=(S, n_tiles),
            in_specs=[
                pl.BlockSpec((1, C, tile_hw), lambda s, j, bb: (s, 0, j)),  # rgb
                pl.BlockSpec((1, 1, tile_hw), lambda s, j, bb: (s, 0, j)),  # gt
                pl.BlockSpec((hidden, C), lambda s, j, bb: (0, 0)),         # w1_rgb
                pl.BlockSpec((hidden, 1), lambda s, j, bb: (0, 0)),         # w1_m
                pl.BlockSpec((hidden, 1), lambda s, j, bb: (0, 0)),         # b1
                pl.BlockSpec((1, hidden), lambda s, j, bb: (0, 0)),         # w2^T
                pl.BlockSpec((1, 1), lambda s, j, bb: (0, 0)),              # b2
            ],
            out_specs=[
                pl.BlockSpec((1, 1, 1), lambda s, j, bb: (s, 0, 0)),  # intersection
                pl.BlockSpec((1, 1, 1), lambda s, j, bb: (s, 0, 0)),  # union
            ],
            scratch_shapes=[pltpu.VMEM((hidden, tile_hw), jnp.float32)],
        ),
        compiler_params=pltpu.CompilerParams(
            # Frame axis "parallel": per-frame output partials are independent,
            # so v7x can split frames across its two TensorCores; the pixel
            # tile axis accumulates into the per-frame block -> "arbitrary".
            dimension_semantics=("parallel", "arbitrary")),
    )(bbox, x3, gt3, params["w1_rgb"], params["w1_m"], params["b1"],
      params["w2"].reshape(1, hidden), params["b2"])


# ----------------------------------------------------------------------------
# Forward glue (mirrors SequenceSegmentationPredictionModel.forward)
# ----------------------------------------------------------------------------
def forward(rgbs_bschw, gt_masks, params, tile_cap=32768):
    if rgbs_bschw.shape[0] != 1:
        raise NotImplementedError(
            "Batch sizes different from 1 are not supported yet.")
    rgbs = rgbs_bschw[0]                                  # (S, 3, H, W)
    S, C, H, W = rgbs.shape
    HW = H * W

    # 1) bbox of the first ground-truth mask: tiny (H, W) reduce in plain jnp
    #    (no extra pallas_call launch; XLA fuses it into the prologue).
    # TODO(synk): the PyTorch original raises ValueError on an empty first
    #    mask; here an empty mask yields a degenerate bbox (no in-box pixels).
    m0 = gt_masks[0] > 0.5
    rows = lax.broadcasted_iota(jnp.int32, (H, W), 0)
    cols = lax.broadcasted_iota(jnp.int32, (H, W), 1)
    BIG = jnp.int32(2 ** 30)
    bbox = jnp.stack([jnp.min(jnp.where(m0, cols, BIG)),
                      jnp.min(jnp.where(m0, rows, BIG)),
                      jnp.max(jnp.where(m0, cols, -1)),
                      jnp.max(jnp.where(m0, rows, -1))]).astype(jnp.int32)

    # 2+3+4) fused box-prompt mask + per-pixel MLP + Jaccard in ONE launch on
    # the natural contiguous layout (free reshapes; no transpose / pad copy).
    x3 = rgbs.reshape(S, C, HW)
    gt3 = gt_masks.reshape(S, 1, HW)
    tile_hw = _choose_tile(HW, tile_cap)

    inter_p, union_p = fused_segmentation_jaccard(
        bbox, x3, gt3, params, W=W, tile_hw=tile_hw)
    error = jnp.sum(inter_p) / jnp.maximum(jnp.sum(union_p), 1.0)

    optimal_error = None          # return_optimal_error = False
    return error, optimal_error


# ----------------------------------------------------------------------------
# Pure-JAX reference (correctness check of the Pallas path)
# ----------------------------------------------------------------------------
def reference_forward(rgbs_bschw, gt_masks, params):
    rgbs = rgbs_bschw[0]
    S, C, H, W = rgbs.shape
    m0 = gt_masks[0] > 0.5
    rows = jnp.arange(H, dtype=jnp.int32)[:, None]
    cols = jnp.arange(W, dtype=jnp.int32)[None, :]
    BIG = jnp.int32(2 ** 30)
    min_x = jnp.min(jnp.where(m0, cols, BIG))
    min_y = jnp.min(jnp.where(m0, rows, BIG))
    max_x = jnp.max(jnp.where(m0, cols, -1))
    max_y = jnp.max(jnp.where(m0, rows, -1))
    bmask = ((cols >= min_x) & (cols <= max_x)
             & (rows >= min_y) & (rows <= max_y)).astype(jnp.float32)

    x_rgb = jnp.transpose(rgbs, (0, 2, 3, 1)).reshape(S * H * W, C)
    x_mask = jnp.concatenate(
        [bmask.reshape(H * W, 1),
         jnp.zeros(((S - 1) * H * W, 1), jnp.float32)], axis=0)

    h = (x_rgb @ params["w1_rgb"].T
         + x_mask * params["w1_m"][:, 0][None, :]
         + params["b1"][:, 0][None, :])
    h = jnp.maximum(h, 0.0)
    logit = h @ params["w2"] + params["b2"][0, 0]
    preds = jax.nn.sigmoid(logit).reshape(S, H, W)

    pb = preds >= 0.5
    tb = gt_masks >= 0.5
    inter = jnp.sum(jnp.logical_and(pb, tb).astype(jnp.float32))
    union = jnp.sum(jnp.logical_or(pb, tb).astype(jnp.float32))
    return inter / jnp.maximum(union, 1.0)


# ----------------------------------------------------------------------------
# Deterministic parameter / input construction
# ----------------------------------------------------------------------------
def init_params(key, hidden=32):
    k1, k2, k3, k4, k5 = jax.random.split(key, 5)

    def q(x):  # multiples of 0.25 in [-1, 1]: exactly representable in bf16/f32
        return jnp.clip(jnp.round(x * 4.0), -4.0, 4.0) / 4.0

    return dict(
        w1_rgb=q(jax.random.normal(k1, (hidden, 3), jnp.float32) * 0.5),
        w1_m=q(jax.random.normal(k2, (hidden, 1), jnp.float32) * 0.5),
        b1=q(jax.random.normal(k3, (hidden, 1), jnp.float32) * 0.1),
        w2=q(jax.random.normal(k4, (hidden, 1), jnp.float32) * 0.5),
        b2=q(jax.random.normal(k5, (1, 1), jnp.float32) * 0.1),
    )


def make_gt_masks(S, H, W):
    rows = jnp.arange(H)[:, None]
    cols = jnp.arange(W)[None, :]
    masks = []
    for i in range(S):
        r0, r1 = 3 + (i % 3), 10 + (i % 3)
        c0, c1 = 2 + (i % 4), 9 + (i % 4)
        m = ((rows >= r0) & (rows <= r1)
             & (cols >= c0) & (cols <= c1)).astype(jnp.float32)
        masks.append(m)
    return jnp.stack(masks, axis=0)


if __name__ == "__main__":
    B, S, C, H, W = 1, 8, 3, 16, 16
    hidden = 32
    key = jax.random.PRNGKey(0)
    k_rgb, k_par = jax.random.split(key)

    # Inputs / weights quantized to values exactly representable at bf16
    # precision so the MXU path of the kernel and the pure-JAX reference are
    # numerically identical (robust correctness check on any TPU generation).
    rgbs = jnp.round(
        jax.random.uniform(k_rgb, (B, S, C, H, W), dtype=jnp.float32) * 8.0) / 8.0
    gt_masks = make_gt_masks(S, H, W)
    params = init_params(k_par, hidden=hidden)

    error, optimal_error = jax.jit(forward)(rgbs, gt_masks, params)
    error = jax.block_until_ready(error)

    ref_error = jax.block_until_ready(reference_forward(rgbs, gt_masks, params))
    assert optimal_error is None
    assert jnp.abs(error - ref_error) < 1e-5, (error, ref_error)

    print("KERNEL_OK")
</pallas_src>

<mosaic_0001>
module attributes {stable_mosaic.version = 11 : i64} {
  func.func @kernel(%arg0: i32, %arg1: i32, %arg2: memref<4xi32, #tpu.memory_space<smem>>, %arg3: memref<1x3x256xf32, #tpu.memory_space<vmem>>, %arg4: memref<1x1x256xf32, #tpu.memory_space<vmem>>, %arg5: memref<32x3xf32, #tpu.memory_space<vmem>>, %arg6: memref<32x1xf32, #tpu.memory_space<vmem>>, %arg7: memref<32x1xf32, #tpu.memory_space<vmem>>, %arg8: memref<1x32xf32, #tpu.memory_space<vmem>>, %arg9: memref<1x1xf32, #tpu.memory_space<vmem>>, %arg10: memref<1x1x1xf32, #tpu.memory_space<vmem>>, %arg11: memref<1x1x1xf32, #tpu.memory_space<vmem>>, %arg12: memref<32x256xf32, #tpu.memory_space<vmem>>) attributes {dimension_semantics = [#tpu.dimension_semantics<parallel>, #tpu.dimension_semantics<arbitrary>], iteration_bounds = array<i64: 8, 1>, scalar_prefetch = 1 : i64, scratch_operands = 1 : i64, tpu.core_type = #tpu.core_type<tc>, window_params = [{transform_indices = @transform_0, window_bounds = array<i64: 1, 3, 256>}, {transform_indices = @transform_1, window_bounds = array<i64: 1, 1, 256>}, {pipeline_mode = #tpu.pipeline_mode<synchronous>, transform_indices = @transform_2, window_bounds = array<i64: 32, 3>}, {pipeline_mode = #tpu.pipeline_mode<synchronous>, transform_indices = @transform_3, window_bounds = array<i64: 32, 1>}, {pipeline_mode = #tpu.pipeline_mode<synchronous>, transform_indices = @transform_4, window_bounds = array<i64: 32, 1>}, {pipeline_mode = #tpu.pipeline_mode<synchronous>, transform_indices = @transform_5, window_bounds = array<i64: 1, 32>}, {pipeline_mode = #tpu.pipeline_mode<synchronous>, transform_indices = @transform_6, window_bounds = array<i64: 1, 1>}, {transform_indices = @transform_7, window_bounds = array<i64: 1, 1, 1>}, {transform_indices = @transform_8, window_bounds = array<i64: 1, 1, 1>}]} {
    %c0_i32 = arith.constant 0 : i32
    %0 = arith.cmpi eq, %arg1, %c0_i32 : i32
    %1 = arith.extui %0 : i1 to i32
    %c0_i32_0 = arith.constant 0 : i32
    %2 = arith.cmpi ne, %1, %c0_i32_0 : i32
    scf.if %2 {
      %cst_38 = arith.constant 0.000000e+00 : f32
      %50 = vector.broadcast %cst_38 : f32 to vector<1x1x1xf32>
      %c0_39 = arith.constant 0 : index
      %c0_40 = arith.constant 0 : index
      %c0_41 = arith.constant 0 : index
      %51 = vector.load %arg10[%c0_39, %c0_40, %c0_41] : memref<1x1x1xf32, #tpu.memory_space<vmem>>, vector<1x1x1xf32>
      tpu.vector_store %arg10[%c0_39, %c0_40, %c0_41], %50 {strides = array<i32>} : memref<1x1x1xf32, #tpu.memory_space<vmem>>, vector<1x1x1xf32>,
      %cst_42 = arith.constant 0.000000e+00 : f32
      %52 = vector.broadcast %cst_42 : f32 to vector<1x1x1xf32>
      %c0_43 = arith.constant 0 : index
      %c0_44 = arith.constant 0 : index
      %c0_45 = arith.constant 0 : index
      %53 = vector.load %arg11[%c0_43, %c0_44, %c0_45] : memref<1x1x1xf32, #tpu.memory_space<vmem>>, vector<1x1x1xf32>
      tpu.vector_store %arg11[%c0_43, %c0_44, %c0_45], %52 {strides = array<i32>} : memref<1x1x1xf32, #tpu.memory_space<vmem>>, vector<1x1x1xf32>,
    } else {
    }
    %c0 = arith.constant 0 : index
    %c0_1 = arith.constant 0 : index
    %3 = vector.load %arg5[%c0, %c0_1] : memref<32x3xf32, #tpu.memory_space<vmem>>, vector<32x3xf32>
    %c0_2 = arith.constant 0 : index
    %c0_3 = arith.constant 0 : index
    %c0_4 = arith.constant 0 : index
    %4 = vector.load %arg3[%c0_2, %c0_3, %c0_4] : memref<1x3x256xf32, #tpu.memory_space<vmem>>, vector<1x3x256xf32>
    %5 = vector.shape_cast %4 : vector<1x3x256xf32> to vector<3x256xf32>
    %cst = arith.constant dense<0.000000e+00> : vector<32x256xf32>
    %6 = tpu.matmul %3, %5, %cst {dimension_numbers = #tpu.dot_dimension_numbers<[1], [0], [0], [1], [0, 0, 1, 1], [], []>} : vector<32x3xf32>, vector<3x256xf32>, vector<32x256xf32> -> vector<32x256xf32>
    %c0_5 = arith.constant 0 : index
    %c0_6 = arith.constant 0 : index
    %7 = vector.load %arg7[%c0_5, %c0_6] : memref<32x1xf32, #tpu.memory_space<vmem>>, vector<32x1xf32>
    %8 = vector.broadcast %7 : vector<32x1xf32> to vector<32x256xf32>
    %9 = arith.addf %6, %8 : vector<32x256xf32>
    %c0_7 = arith.constant 0 : index
    %c0_8 = arith.constant 0 : index
    %10 = vector.load %arg12[%c0_7, %c0_8] : memref<32x256xf32, #tpu.memory_space<vmem>>, vector<32x256xf32>
    tpu.vector_store %arg12[%c0_7, %c0_8], %9 {strides = array<i32>} : memref<32x256xf32, #tpu.memory_space<vmem>>, vector<32x256xf32>,
    %c0_i32_9 = arith.constant 0 : i32
    %11 = arith.cmpi eq, %arg0, %c0_i32_9 : i32
    %12 = arith.extui %11 : i1 to i32
    %c0_i32_10 = arith.constant 0 : i32
    %13 = arith.cmpi ne, %12, %c0_i32_10 : i32
    scf.if %13 {
      %c256_i32 = arith.constant 256 : i32
      %50 = arith.muli %arg1, %c256_i32 : i32
      %51 = tpu.iota {dimensions = array<i32: 1>} : vector<1x256xi32>
      %52 = vector.broadcast %50 : i32 to vector<1x256xi32>
      %53 = arith.addi %52, %51 : vector<1x256xi32>
      %c4_i32 = arith.constant 4 : i32
      %54 = vector.broadcast %c4_i32 : i32 to vector<1x256xi32>
      %55 = arith.shrsi %53, %54 : vector<1x256xi32>
      %c15_i32 = arith.constant 15 : i32
      %56 = vector.broadcast %c15_i32 : i32 to vector<1x256xi32>
      %57 = arith.andi %53, %56 : vector<1x256xi32>
      %c0_38 = arith.constant 0 : index
      %58 = memref.load %arg2[%c0_38] : memref<4xi32, #tpu.memory_space<smem>>
      %59 = vector.broadcast %58 : i32 to vector<1x256xi32>
      %60 = arith.cmpi sge, %57, %59 : vector<1x256xi32>
      %c2 = arith.constant 2 : index
      %61 = memref.load %arg2[%c2] : memref<4xi32, #tpu.memory_space<smem>>
      %62 = vector.broadcast %61 : i32 to vector<1x256xi32>
      %63 = arith.cmpi sle, %57, %62 : vector<1x256xi32>
      %64 = arith.andi %60, %63 : vector<1x256xi1>
      %c1 = arith.constant 1 : index
      %65 = memref.load %arg2[%c1] : memref<4xi32, #tpu.memory_space<smem>>
      %66 = vector.broadcast %65 : i32 to vector<1x256xi32>
      %67 = arith.cmpi sge, %55, %66 : vector<1x256xi32>
      %68 = arith.andi %64, %67 : vector<1x256xi1>
      %c3 = arith.constant 3 : index
      %69 = memref.load %arg2[%c3] : memref<4xi32, #tpu.memory_space<smem>>
      %70 = vector.broadcast %69 : i32 to vector<1x256xi32>
      %71 = arith.cmpi sle, %55, %70 : vector<1x256xi32>
      %72 = arith.andi %68, %71 : vector<1x256xi1>
      %c0_39 = arith.constant 0 : index
      %c0_40 = arith.constant 0 : index
      %73 = vector.load %arg12[%c0_39, %c0_40] : memref<32x256xf32, #tpu.memory_space<vmem>>, vector<32x256xf32>
      %c0_41 = arith.constant 0 : index
      %c0_42 = arith.constant 0 : index
      %74 = vector.load %arg6[%c0_41, %c0_42] : memref<32x1xf32, #tpu.memory_space<vmem>>, vector<32x1xf32>
      %75 = arith.extui %72 : vector<1x256xi1> to vector<1x256xi32>
      %76 = arith.sitofp %75 : vector<1x256xi32> to vector<1x256xf32>
      %77 = vector.broadcast %74 : vector<32x1xf32> to vector<32x256xf32>
      %78 = vector.broadcast %76 : vector<1x256xf32> to vector<32x256xf32>
      %79 = arith.mulf %77, %78 : vector<32x256xf32>
      %80 = arith.addf %73, %79 : vector<32x256xf32>
      %c0_43 = arith.constant 0 : index
      %c0_44 = arith.constant 0 : index
      %81 = vector.load %arg12[%c0_43, %c0_44] : memref<32x256xf32, #tpu.memory_space<vmem>>, vector<32x256xf32>
      tpu.vector_store %arg12[%c0_43, %c0_44], %80 {strides = array<i32>} : memref<32x256xf32, #tpu.memory_space<vmem>>, vector<32x256xf32>,
    } else {
    }
    %c0_11 = arith.constant 0 : index
    %c0_12 = arith.constant 0 : index
    %14 = vector.load %arg12[%c0_11, %c0_12] : memref<32x256xf32, #tpu.memory_space<vmem>>, vector<32x256xf32>
    %cst_13 = arith.constant 0.000000e+00 : f32
    %15 = vector.broadcast %cst_13 : f32 to vector<32x256xf32>
    %16 = arith.maximumf %14, %15 : vector<32x256xf32>
    %c0_14 = arith.constant 0 : index
    %c0_15 = arith.constant 0 : index
    %17 = vector.load %arg8[%c0_14, %c0_15] : memref<1x32xf32, #tpu.memory_space<vmem>>, vector<1x32xf32>
    %cst_16 = arith.constant dense<0.000000e+00> : vector<1x256xf32>
    %18 = tpu.matmul %17, %16, %cst_16 {dimension_numbers = #tpu.dot_dimension_numbers<[1], [0], [0], [1], [0, 0, 1, 1], [], []>} : vector<1x32xf32>, vector<32x256xf32>, vector<1x256xf32> -> vector<1x256xf32>
    %c0_17 = arith.constant 0 : index
    %c0_18 = arith.constant 0 : index
    %19 = vector.load %arg9[%c0_17, %c0_18] : memref<1x1xf32, #tpu.memory_space<vmem>>, vector<1x1xf32>
    %20 = vector.broadcast %19 : vector<1x1xf32> to vector<1x256xf32>
    %21 = arith.addf %18, %20 : vector<1x256xf32>
    %cst_19 = arith.constant 0.000000e+00 : f32
    %22 = vector.broadcast %cst_19 : f32 to vector<1x256xf32>
    %23 = arith.cmpf oge, %21, %22 : vector<1x256xf32>
    %c0_20 = arith.constant 0 : index
    %c0_21 = arith.constant 0 : index
    %c0_22 = arith.constant 0 : index
    %24 = vector.load %arg4[%c0_20, %c0_21, %c0_22] : memref<1x1x256xf32, #tpu.memory_space<vmem>>, vector<1x1x256xf32>
    %25 = vector.shape_cast %24 : vector<1x1x256xf32> to vector<1x256xf32>
    %cst_23 = arith.constant 5.000000e-01 : f32
    %26 = vector.broadcast %cst_23 : f32 to vector<1x256xf32>
    %27 = arith.cmpf oge, %25, %26 : vector<1x256xf32>
    %c0_24 = arith.constant 0 : index
    %c0_25 = arith.constant 0 : index
    %c0_26 = arith.constant 0 : index
    %28 = vector.load %arg10[%c0_24, %c0_25, %c0_26] : memref<1x1x1xf32, #tpu.memory_space<vmem>>, vector<1x1x1xf32>
    %29 = arith.andi %23, %27 : vector<1x256xi1>
    %30 = arith.extui %29 : vector<1x256xi1> to vector<1x256xi32>
    %31 = arith.sitofp %30 : vector<1x256xi32> to vector<1x256xf32>
    %32 = vector.shape_cast %31 : vector<1x256xf32> to vector<1x1x256xf32>
    %cst_27 = arith.constant dense<0.000000e+00> : vector<1xf32>
    %33 = vector.multi_reduction <add>, %32, %cst_27 [1, 2] : vector<1x1x256xf32> to vector<1xf32>
    %34 = vector.shape_cast %33 : vector<1xf32> to vector<1x1x1xf32>
    %35 = vector.extract %34[0, 0, 0] : f32 from vector<1x1x1xf32>
    %36 = vector.broadcast %35 : f32 to vector<1x1x1xf32>
    %37 = arith.addf %28, %36 : vector<1x1x1xf32>
    %c0_28 = arith.constant 0 : index
    %c0_29 = arith.constant 0 : index
    %c0_30 = arith.constant 0 : index
    %38 = vector.load %arg10[%c0_28, %c0_29, %c0_30] : memref<1x1x1xf32, #tpu.memory_space<vmem>>, vector<1x1x1xf32>
    tpu.vector_store %arg10[%c0_28, %c0_29, %c0_30], %37 {strides = array<i32>} : memref<1x1x1xf32, #tpu.memory_space<vmem>>, vector<1x1x1xf32>,
    %c0_31 = arith.constant 0 : index
    %c0_32 = arith.constant 0 : index
    %c0_33 = arith.constant 0 : index
    %39 = vector.load %arg11[%c0_31, %c0_32, %c0_33] : memref<1x1x1xf32, #tpu.memory_space<vmem>>, vector<1x1x1xf32>
    %40 = arith.ori %23, %27 : vector<1x256xi1>
    %41 = arith.extui %40 : vector<1x256xi1> to vector<1x256xi32>
    %42 = arith.sitofp %41 : vector<1x256xi32> to vector<1x256xf32>
    %43 = vector.shape_cast %42 : vector<1x256xf32> to vector<1x1x256xf32>
    %cst_34 = arith.constant dense<0.000000e+00> : vector<1xf32>
    %44 = vector.multi_reduction <add>, %43, %cst_34 [1, 2] : vector<1x1x256xf32> to vector<1xf32>
    %45 = vector.shape_cast %44 : vector<1xf32> to vector<1x1x1xf32>
    %46 = vector.extract %45[0, 0, 0] : f32 from vector<1x1x1xf32>
    %47 = vector.broadcast %46 : f32 to vector<1x1x1xf32>
    %48 = arith.addf %39, %47 : vector<1x1x1xf32>
    %c0_35 = arith.constant 0 : index
    %c0_36 = arith.constant 0 : index
    %c0_37 = arith.constant 0 : index
    %49 = vector.load %arg11[%c0_35, %c0_36, %c0_37] : memref<1x1x1xf32, #tpu.memory_space<vmem>>, vector<1x1x1xf32>
    tpu.vector_store %arg11[%c0_35, %c0_36, %c0_37], %48 {strides = array<i32>} : memref<1x1x1xf32, #tpu.memory_space<vmem>>, vector<1x1x1xf32>,
    return
  }
  func.func @transform_0(%arg0: i32, %arg1: i32, %arg2: memref<4xi32, #tpu.memory_space<smem>>) -> (i32, i32, i32) {
    %c0_i32 = arith.constant 0 : i32
    %c0_i32_0 = arith.constant 0 : i32
    return %arg0, %c0_i32, %arg1 : i32, i32, i32
  }
  func.func @transform_1(%arg0: i32, %arg1: i32, %arg2: memref<4xi32, #tpu.memory_space<smem>>) -> (i32, i32, i32) {
    %c0_i32 = arith.constant 0 : i32
    %c0_i32_0 = arith.constant 0 : i32
    return %arg0, %c0_i32, %arg1 : i32, i32, i32
  }
  func.func @transform_2(%arg0: i32, %arg1: i32, %arg2: memref<4xi32, #tpu.memory_space<smem>>) -> (i32, i32) {
    %c0_i32 = arith.constant 0 : i32
    %c0_i32_0 = arith.constant 0 : i32
    %c0_i32_1 = arith.constant 0 : i32
    return %c0_i32, %c0_i32_0 : i32, i32
  }
  func.func @transform_3(%arg0: i32, %arg1: i32, %arg2: memref<4xi32, #tpu.memory_space<smem>>) -> (i32, i32) {
    %c0_i32 = arith.constant 0 : i32
    %c0_i32_0 = arith.constant 0 : i32
    %c0_i32_1 = arith.constant 0 : i32
    return %c0_i32, %c0_i32_0 : i32, i32
  }
  func.func @transform_4(%arg0: i32, %arg1: i32, %arg2: memref<4xi32, #tpu.memory_space<smem>>) -> (i32, i32) {
    %c0_i32 = arith.constant 0 : i32
    %c0_i32_0 = arith.constant 0 : i32
    %c0_i32_1 = arith.constant 0 : i32
    return %c0_i32, %c0_i32_0 : i32, i32
  }
  func.func @transform_5(%arg0: i32, %arg1: i32, %arg2: memref<4xi32, #tpu.memory_space<smem>>) -> (i32, i32) {
    %c0_i32 = arith.constant 0 : i32
    %c0_i32_0 = arith.constant 0 : i32
    %c0_i32_1 = arith.constant 0 : i32
    return %c0_i32, %c0_i32_0 : i32, i32
  }
  func.func @transform_6(%arg0: i32, %arg1: i32, %arg2: memref<4xi32, #tpu.memory_space<smem>>) -> (i32, i32) {
    %c0_i32 = arith.constant 0 : i32
    %c0_i32_0 = arith.constant 0 : i32
    %c0_i32_1 = arith.constant 0 : i32
    return %c0_i32, %c0_i32_0 : i32, i32
  }
  func.func @transform_7(%arg0: i32, %arg1: i32, %arg2: memref<4xi32, #tpu.memory_space<smem>>) -> (i32, i32, i32) {
    %c0_i32 = arith.constant 0 : i32
    %c0_i32_0 = arith.constant 0 : i32
    %c0_i32_1 = arith.constant 0 : i32
    return %arg0, %c0_i32, %c0_i32_0 : i32, i32, i32
  }
  func.func @transform_8(%arg0: i32, %arg1: i32, %arg2: memref<4xi32, #tpu.memory_space<smem>>) -> (i32, i32, i32) {
    %c0_i32 = arith.constant 0 : i32
    %c0_i32_0 = arith.constant 0 : i32
    %c0_i32_1 = arith.constant 0 : i32
    return %arg0, %c0_i32, %c0_i32_0 : i32, i32, i32
  }
}

</mosaic_0001>

<llo_original>
// kernel: forward.1
$region0: #{forward.1}
  #allocation0 [shape = 'u32[]', space=smem, size = 0x4, offset = 0x4, fixed_abs, tag = 'smem constant byte address 0x4 - core index']
  #allocation1 [shape = 'u32[144,128]{1,0:T(1,128)}', space=vmem, size = 0x12000, scoped, tag = 'internal scratch']
  #allocation2 [shape = 'f32[32,256]{1,0:T(8,128)}', space=vmem, size = 0x8000, scoped, tag = 'scratch operand']
  #allocation3 [shape = 's32[1]{0}', space=sflag, size = 0x4, scoped, tag = 'scoped memory for forward.1']
  #allocation4 [shape = 'u8[512]{0}', space=smem, size = 0x200, scoped, tag = 'prefetched SMEM operand 0']
  #allocation5 [shape = 'f32[1,1]{1,0:T(1,128)S(1)}', space=vmem, size = 0x200, scoped, tag = 'scoped memory for forward.1']
  %s0 = inlined_call_operand.vmem [shape: s32[4], index: 0, kind: input, shape index: {}]
  %s1 = inlined_call_operand.vmem [shape: f32[8,3,256], index: 1, kind: input, shape index: {}]
  %s2 = inlined_call_operand.vmem [shape: f32[8,1,256], index: 2, kind: input, shape index: {}]
  %s3 = inlined_call_operand.vmem [shape: f32[32,3], index: 3, kind: input, shape index: {}]
  %s4 = inlined_call_operand.vmem [shape: f32[32,1], index: 4, kind: input, shape index: {}]
  %s5 = inlined_call_operand.vmem [shape: f32[32,1], index: 5, kind: input, shape index: {}]
  %s6 = inlined_call_operand.vmem [shape: f32[1,32], index: 6, kind: input, shape index: {}]
  %s7 = inlined_call_operand.<no memory space> [shape: f32[1,1], index: 7, kind: input, shape index: {}]
  %s8 = inlined_call_operand.vmem [shape: f32[8,1,1], index: 8, kind: output, shape index: {0}]
  %s9 = inlined_call_operand.vmem [shape: f32[8,1,1], index: 9, kind: output, shape index: {1}]
  %10 = xla_tuple %s8, %s9
  %s11 = sld [smem:[#allocation0]]
  $region77: #{forward.1} parent=0
    _
  %s13 = ssub.s32 1, %s11
  %s14 = scalar_select 0, %s13, %s11
  %s15 = sshll.u32 %s0, 4
  %s16 = int_to_ptr.vmem [resolvable:$true] %s15
  %18 = dma.vmem_to_smem %s16, 16, [#allocation4], [#allocation3]
  %v19 = vstv %s7
  %20 = vst [vmem:[#allocation5] sm:$0x1] %v19
  %21 = dma.done [#allocation3], 16
  %22 = sfence
  loop: start=0, step=1, limit=10
  $region2: #{forward.1} parent=0 // loop_pre_header
    _
  $region3: #{forward.1} parent=0 // loop_header
    %s24 = sphi 0, %s28
    %p25 = scmp.ge.s32.totalorder %s24, 10
    %s31 = sphi 0, %s43
    %s32 = sphi 0, %s39
    %s33 = sphi 0, %s31
    %s34 = sphi 0, %s32
    %s35 = sphi 0, %s33
    %s36 = sphi 0, %s34
    %s48 = sphi 0, %s50
    %s51 = sphi 0, %s48
    %s52 = sphi 0, %s51
    %s68 = sphi 0, %s52
    %s76 = sphi 0, %s78
    %s79 = sphi 0, %s76
    %s80 = sphi 0, %s79
    %s96 = sphi 0, %s80
    %s100 = sphi 0, %s100
    %s102 = sphi 0, %s100
    %s103 = sphi 0, %s102
    %s117 = sphi 0, %s103
    %s121 = sphi 0, %s121
    %s123 = sphi 0, %s121
    %s124 = sphi 0, %s123
    %s138 = sphi 0, %s124
    %s142 = sphi 0, %s142
    %s144 = sphi 0, %s142
    %s145 = sphi 0, %s144
    %s159 = sphi 0, %s145
    %s163 = sphi 0, %s163
    %s165 = sphi 0, %s163
    %s166 = sphi 0, %s165
    %s180 = sphi 0, %s166
    %s184 = sphi 0, %s184
    %s186 = sphi 0, %s184
    %s187 = sphi 0, %s186
    %s201 = sphi 0, %s187
    %s207 = sphi 0, %s209
    %s210 = sphi 0, %s207
    %s211 = sphi 0, %s210
    %s227 = sphi 0, %s211
    %s233 = sphi 0, %s235
    %s236 = sphi 0, %s233
    %s237 = sphi 0, %s236
    %s253 = sphi 0, %s237
  $region4: #{forward.1} parent=0 // loop_header_branch
    %27 = sbr.rel (%p25) target = $region8
  $region5: #{forward.1} parent=0 // loop_body
    %s29 = ssub.s32 %s24, 1
    %s30 = ssub.s32 %s24, 2
    %s37 = sadd.s32 1, %s32
    %p38 = scmp.ge.s32.totalorder %s37, 1
    %s39 = scalar_select %p38, 0, %s37
    %s40 = sadd.s32 1, %s31
    %s41 = scalar_select %p38, %s40, %s31
    %p42 = scmp.ge.s32.totalorder %s41, 8
    %s43 = scalar_select %p42, 0, %s41
    %s44 = ssub.s32 %s31, %s43
    %s45 = ssub.s32 %s32, %s39
    %s46 = sor.u32 %s44, %s45
    %p47 = scmp.eq.s32.totalorder %s46, 0
    %s49 = sadd.s32 %s48, 1
    %s50 = scalar_select %p47, %s48, %s49
    %p53 = pneg %p47
    %p54 = scmp.eq.s32.totalorder %s24, 7
    %p55 = por %p53, %p54
    %p56 = scmp.ne.s32.totalorder %s48, %s51
    %p57 = scmp.eq.s32.totalorder %s24, 0
    %p58 = por %p56, %p57
    %p59 = scmp.ne.s32.totalorder %s48, %s51
    %p60 = scmp.eq.s32.totalorder %s29, 7
    %p61 = por %p59, %p60
    %p62 = scmp.ne.s32.totalorder %s51, %s52
    %p63 = scmp.eq.s32.totalorder %s29, 0
    %p64 = por %p62, %p63
    %p65 = scmp.ne.s32.totalorder %s51, %s52
    %p66 = scmp.eq.s32.totalorder %s30, 7
    %p67 = por %p65, %p66
    %p69 = scmp.ne.s32.totalorder %s52, %s68
    %p70 = scmp.eq.s32.totalorder %s30, 0
    %p71 = por %p69, %p70
    %s72 = ssub.s32 %s31, %s43
    %s73 = ssub.s32 %s32, %s39
    %s74 = sor.u32 %s72, %s73
    %p75 = scmp.eq.s32.totalorder %s74, 0
    %s77 = sadd.s32 %s76, 1
    %s78 = scalar_select %p75, %s76, %s77
    %p81 = pneg %p75
    %p82 = scmp.eq.s32.totalorder %s24, 7
    %p83 = por %p81, %p82
    %p84 = scmp.ne.s32.totalorder %s76, %s79
    %p85 = scmp.eq.s32.totalorder %s24, 0
    %p86 = por %p84, %p85
    %p87 = scmp.ne.s32.totalorder %s76, %s79
    %p88 = scmp.eq.s32.totalorder %s29, 7
    %p89 = por %p87, %p88
    %p90 = scmp.ne.s32.totalorder %s79, %s80
    %p91 = scmp.eq.s32.totalorder %s29, 0
    %p92 = por %p90, %p91
    %p93 = scmp.ne.s32.totalorder %s79, %s80
    %p94 = scmp.eq.s32.totalorder %s30, 7
    %p95 = por %p93, %p94
    %p97 = scmp.ne.s32.totalorder %s80, %s96
    %p98 = scmp.eq.s32.totalorder %s30, 0
    %p99 = por %p97, %p98
    %s101 = sadd.s32 %s100, 1
    %p104 = scmp.eq.s32.totalorder %s24, 7
    %p105 = scmp.ne.s32.totalorder %s100, %s102
    %p106 = scmp.eq.s32.totalorder %s24, 0
    %p107 = por %p105, %p106
    %p108 = scmp.ne.s32.totalorder %s100, %s102
    %p109 = scmp.eq.s32.totalorder %s29, 7
    %p110 = por %p108, %p109
    %p111 = scmp.ne.s32.totalorder %s102, %s103
    %p112 = scmp.eq.s32.totalorder %s29, 0
    %p113 = por %p111, %p112
    %p114 = scmp.ne.s32.totalorder %s102, %s103
    %p115 = scmp.eq.s32.totalorder %s30, 7
    %p116 = por %p114, %p115
    %p118 = scmp.ne.s32.totalorder %s103, %s117
    %p119 = scmp.eq.s32.totalorder %s30, 0
    %p120 = por %p118, %p119
    %s122 = sadd.s32 %s121, 1
    %p125 = scmp.eq.s32.totalorder %s24, 7
    %p126 = scmp.ne.s32.totalorder %s121, %s123
    %p127 = scmp.eq.s32.totalorder %s24, 0
    %p128 = por %p126, %p127
    %p129 = scmp.ne.s32.totalorder %s121, %s123
    %p130 = scmp.eq.s32.totalorder %s29, 7
    %p131 = por %p129, %p130
    %p132 = scmp.ne.s32.totalorder %s123, %s124
    %p133 = scmp.eq.s32.totalorder %s29, 0
    %p134 = por %p132, %p133
    %p135 = scmp.ne.s32.totalorder %s123, %s124
    %p136 = scmp.eq.s32.totalorder %s30, 7
    %p137 = por %p135, %p136
    %p139 = scmp.ne.s32.totalorder %s124, %s138
    %p140 = scmp.eq.s32.totalorder %s30, 0
    %p141 = por %p139, %p140
    %s143 = sadd.s32 %s142, 1
    %p146 = scmp.eq.s32.totalorder %s24, 7
    %p147 = scmp.ne.s32.totalorder %s142, %s144
    %p148 = scmp.eq.s32.totalorder %s24, 0
    %p149 = por %p147, %p148
    %p150 = scmp.ne.s32.totalorder %s142, %s144
    %p151 = scmp.eq.s32.totalorder %s29, 7
    %p152 = por %p150, %p151
    %p153 = scmp.ne.s32.totalorder %s144, %s145
    %p154 = scmp.eq.s32.totalorder %s29, 0
    %p155 = por %p153, %p154
    %p156 = scmp.ne.s32.totalorder %s144, %s145
    %p157 = scmp.eq.s32.totalorder %s30, 7
    %p158 = por %p156, %p157
    %p160 = scmp.ne.s32.totalorder %s145, %s159
    %p161 = scmp.eq.s32.totalorder %s30, 0
    %p162 = por %p160, %p161
    %s164 = sadd.s32 %s163, 1
    %p167 = scmp.eq.s32.totalorder %s24, 7
    %p168 = scmp.ne.s32.totalorder %s163, %s165
    %p169 = scmp.eq.s32.totalorder %s24, 0
    %p170 = por %p168, %p169
    %p171 = scmp.ne.s32.totalorder %s163, %s165
    %p172 = scmp.eq.s32.totalorder %s29, 7
    %p173 = por %p171, %p172
    %p174 = scmp.ne.s32.totalorder %s165, %s166
    %p175 = scmp.eq.s32.totalorder %s29, 0
    %p176 = por %p174, %p175
    %p177 = scmp.ne.s32.totalorder %s165, %s166
    %p178 = scmp.eq.s32.totalorder %s30, 7
    %p179 = por %p177, %p178
    %p181 = scmp.ne.s32.totalorder %s166, %s180
    %p182 = scmp.eq.s32.totalorder %s30, 0
    %p183 = por %p181, %p182
    %s185 = sadd.s32 %s184, 1
    %p188 = scmp.eq.s32.totalorder %s24, 7
    %p189 = scmp.ne.s32.totalorder %s184, %s186
    %p190 = scmp.eq.s32.totalorder %s24, 0
    %p191 = por %p189, %p190
    %p192 = scmp.ne.s32.totalorder %s184, %s186
    %p193 = scmp.eq.s32.totalorder %s29, 7
    %p194 = por %p192, %p193
    %p195 = scmp.ne.s32.totalorder %s186, %s187
    %p196 = scmp.eq.s32.totalorder %s29, 0
    %p197 = por %p195, %p196
    %p198 = scmp.ne.s32.totalorder %s186, %s187
    %p199 = scmp.eq.s32.totalorder %s30, 7
    %p200 = por %p198, %p199
    %p202 = scmp.ne.s32.totalorder %s187, %s201
    %p203 = scmp.eq.s32.totalorder %s30, 0
    %p204 = por %p202, %p203
    %s205 = ssub.s32 %s31, %s43
    %p206 = scmp.eq.s32.totalorder %s205, 0
    %s208 = sadd.s32 %s207, 1
    %s209 = scalar_select %p206, %s207, %s208
    %p212 = pneg %p206
    %p213 = scmp.eq.s32.totalorder %s24, 7
    %p214 = por %p212, %p213
    %p215 = scmp.ne.s32.totalorder %s207, %s210
    %p216 = scmp.eq.s32.totalorder %s24, 0
    %p217 = por %p215, %p216
    %p218 = scmp.ne.s32.totalorder %s207, %s210
    %p219 = scmp.eq.s32.totalorder %s29, 7
    %p220 = por %p218, %p219
    %p221 = scmp.ne.s32.totalorder %s210, %s211
    %p222 = scmp.eq.s32.totalorder %s29, 0
    %p223 = por %p221, %p222
    %p224 = scmp.ne.s32.totalorder %s210, %s211
    %p225 = scmp.eq.s32.totalorder %s30, 7
    %p226 = por %p224, %p225
    %p228 = scmp.ne.s32.totalorder %s211, %s227
    %p229 = scmp.eq.s32.totalorder %s30, 0
    %p230 = por %p228, %p229
    %s231 = ssub.s32 %s31, %s43
    %p232 = scmp.eq.s32.totalorder %s231, 0
    %s234 = sadd.s32 %s233, 1
    %s235 = scalar_select %p232, %s233, %s234
    %p238 = pneg %p232
    %p239 = scmp.eq.s32.totalorder %s24, 7
    %p240 = por %p238, %p239
    %p241 = scmp.ne.s32.totalorder %s233, %s236
    %p242 = scmp.eq.s32.totalorder %s24, 0
    %p243 = por %p241, %p242
    %p244 = scmp.ne.s32.totalorder %s233, %s236
    %p245 = scmp.eq.s32.totalorder %s29, 7
    %p246 = por %p244, %p245
    %p247 = scmp.ne.s32.totalorder %s236, %s237
    %p248 = scmp.eq.s32.totalorder %s29, 0
    %p249 = por %p247, %p248
    %p250 = scmp.ne.s32.totalorder %s236, %s237
    %p251 = scmp.eq.s32.totalorder %s30, 7
    %p252 = por %p250, %p251
    %p254 = scmp.ne.s32.totalorder %s237, %s253
    %p255 = scmp.eq.s32.totalorder %s30, 0
    %p256 = por %p254, %p255
    %p257 = scmp.le.s32.totalorder 1, %s24
    %p258 = scmp.lt.s32.totalorder %s24, 9
    %p259 = pnand %p257, %p258
    %p260 = pneg %p259
    // Predicated region
    $region9: #{forward.1} parent=5 // pred_check
      _
    $region10: #{forward.1} parent=5 // pred_check_branch
      %262 = sbr.rel (%p259) target = $region12
    $region11: #{forward.1} parent=5 // pred_region
      %s263 = ssub.s32 %s24, 1
      // Predicated region
      $region13: #{forward.1} parent=11 // pred_check
        %p264 = pneg %p113
      $region14: #{forward.1} parent=11 // pred_check_branch
        %266 = sbr.rel (%p264) target = $region16
      $region15: #{forward.1} parent=11 // pred_region
        _
      $region16: #{forward.1} parent=11 // pred_fallthru
        _
      // Predicated region
      $region17: #{forward.1} parent=11 // pred_check
        %p267 = pneg %p134
      $region18: #{forward.1} parent=11 // pred_check_branch
        %269 = sbr.rel (%p267) target = $region20
      $region19: #{forward.1} parent=11 // pred_region
        _
      $region20: #{forward.1} parent=11 // pred_fallthru
        _
      // Predicated region
      $region21: #{forward.1} parent=11 // pred_check
        %p270 = pneg %p155
      $region22: #{forward.1} parent=11 // pred_check_branch
        %272 = sbr.rel (%p270) target = $region24
      $region23: #{forward.1} parent=11 // pred_region
        _
      $region24: #{forward.1} parent=11 // pred_fallthru
        _
      // Predicated region
      $region25: #{forward.1} parent=11 // pred_check
        %p273 = pneg %p176
      $region26: #{forward.1} parent=11 // pred_check_branch
        %275 = sbr.rel (%p273) target = $region28
      $region27: #{forward.1} parent=11 // pred_region
        _
      $region28: #{forward.1} parent=11 // pred_fallthru
        _
      // Predicated region
      $region29: #{forward.1} parent=11 // pred_check
        %p276 = pneg %p197
      $region30: #{forward.1} parent=11 // pred_check_branch
        %278 = sbr.rel (%p276) target = $region32
      $region31: #{forward.1} parent=11 // pred_region
        _
      $region32: #{forward.1} parent=11 // pred_fallthru
        _
    $region12: #{forward.1} parent=5 // pred_fallthru
      _
    %p279 = scmp.lt.s32.totalorder %s24, 8
    // Predicated region
    $region33: #{forward.1} parent=5 // pred_check
      %p280 = pneg %p279
    $region34: #{forward.1} parent=5 // pred_check_branch
      %282 = sbr.rel (%p280) target = $region36
    $region35: #{forward.1} parent=5 // pred_region
      // Predicated region
      $region37: #{forward.1} parent=35 // pred_check
        %p283 = pneg %p58
      $region38: #{forward.1} parent=35 // pred_check_branch
        %285 = sbr.rel (%p283) target = $region40
      $region39: #{forward.1} parent=35 // pred_region
        %s286 = smul.u32 2, %s32
        %p287 = scmp.lt.s32.totalorder %s31, 7
        %s288 = scalar_select %p287, %s31, 7
        %p289 = scmp.lt.s32.totalorder %s286, 1
        %s290 = scalar_select %p289, %s286, 1
        %s291 = smul.addr %s288, 2
        %s292 = sadd.s32 %s290, %s291
        %s293 = smul.addr %s292, 4
        %s294 = scalar_lea.vmem %s1, %s293
        %s295 = smul.u32 2, %s32
      $region40: #{forward.1} parent=35 // pred_fallthru
        _
      // Predicated region
      $region41: #{forward.1} parent=35 // pred_check
        %p296 = pneg %p86
      $region42: #{forward.1} parent=35 // pred_check_branch
        %298 = sbr.rel (%p296) target = $region44
      $region43: #{forward.1} parent=35 // pred_region
        %s299 = smul.u32 2, %s32
        %p300 = scmp.lt.s32.totalorder %s31, 7
        %s301 = scalar_select %p300, %s31, 7
        %p302 = scmp.lt.s32.totalorder %s299, 1
        %s303 = scalar_select %p302, %s299, 1
        %s304 = smul.addr %s301, 2
        %s305 = sadd.s32 %s303, %s304
        %s306 = scalar_lea.vmem %s2, %s305
        %s307 = smul.u32 2, %s32
      $region44: #{forward.1} parent=35 // pred_fallthru
        _
    $region36: #{forward.1} parent=5 // pred_fallthru
      _
    %p308 = scmp.le.s32.totalorder 1, %s24
    %p309 = scmp.lt.s32.totalorder %s24, 9
    %p310 = pnand %p308, %p309
    %p311 = pneg %p310
    // Predicated region
    $region45: #{forward.1} parent=5 // pred_check
      _
    $region46: #{forward.1} parent=5 // pred_check_branch
      %313 = sbr.rel (%p310) target = $region48
    $region47: #{forward.1} parent=5 // pred_region
      %s314 = ssub.s32 %s24, 1
      %s315 = smul.u32 2, %s34
      %p316 = scmp.lt.s32.totalorder %s33, 7
      %s317 = scalar_select %p316, %s33, 7
      %p318 = scmp.lt.s32.totalorder %s315, 1
      %s319 = scalar_select %p318, %s315, 1
      %s320 = smul.addr %s317, 2
      %s321 = sadd.s32 %s319, %s320
      %s322 = smul.addr %s321, 4
      %s323 = scalar_lea.vmem %s1, %s322
      %p324 = pneg %p64
      %p325 = pneg %p61
      %s326 = smul.u32 2, %s34
      %p327 = scmp.lt.s32.totalorder %s33, 7
      %s328 = scalar_select %p327, %s33, 7
      %p329 = scmp.lt.s32.totalorder %s326, 1
      %s330 = scalar_select %p329, %s326, 1
      %s331 = smul.addr %s328, 2
      %s332 = sadd.s32 %s330, %s331
      %s333 = scalar_lea.vmem %s2, %s332
      %p334 = pneg %p92
      %p335 = pneg %p89
      %p336 = pneg %p113
      %p337 = pneg %p110
      %p338 = pneg %p134
      %p339 = pneg %p131
      %p340 = pneg %p155
      %p341 = pneg %p152
      %p342 = pneg %p176
      %p343 = pneg %p173
      %p344 = pneg %p197
      %p345 = pneg %p194
      %p346 = pneg %p223
      %p347 = pneg %p220
      %p348 = scmp.lt.s32.totalorder %s33, 7
      %s349 = scalar_select %p348, %s33, 7
      %s350 = scalar_lea.vmem %s8, %s349
      %p351 = pneg %p249
      %p352 = pneg %p246
      %p353 = scmp.lt.s32.totalorder %s33, 7
      %s354 = scalar_select %p353, %s33, 7
      %s355 = scalar_lea.vmem %s9, %s354
      %s356 = smul.u32 2, %s34
      %p357 = scmp.lt.s32.totalorder %s33, 7
      %s358 = scalar_select %p357, %s33, 7
      %p359 = scmp.lt.s32.totalorder %s356, 1
      %s360 = scalar_select %p359, %s356, 1
      %s361 = smul.addr %s358, 2
      %s362 = sadd.s32 %s360, %s361
      %s363 = smul.addr %s362, 4
      %s364 = scalar_lea.vmem %s1, %s363
      %s365 = smul.u32 2, %s34
      %s366 = smul.u32 2, %s34
      %p367 = scmp.lt.s32.totalorder %s33, 7
      %s368 = scalar_select %p367, %s33, 7
      %p369 = scmp.lt.s32.totalorder %s366, 1
      %s370 = scalar_select %p369, %s366, 1
      %s371 = smul.addr %s368, 2
      %s372 = sadd.s32 %s370, %s371
      %s373 = scalar_lea.vmem %s2, %s372
      %s374 = smul.u32 2, %s34
      %p375 = scmp.lt.s32.totalorder %s33, 7
      %s376 = scalar_select %p375, %s33, 7
      %s377 = scalar_lea.vmem %s8, %s376
      %p378 = scmp.lt.s32.totalorder %s33, 7
      %s379 = scalar_select %p378, %s33, 7
      %s380 = scalar_lea.vmem %s9, %s379
      %p381 = scmp.eq.s32.totalorder %s34, 0
      // Predicated region
      $region49: #{forward.1} parent=47 // pred_check
        %p382 = pneg %p381
      $region50: #{forward.1} parent=47 // pred_check_branch
        %384 = sbr.rel (%p382) target = $region52
      $region51: #{forward.1} parent=47 // pred_region
        %vm385 = vcmask 0
        %386 = vst.msk [vmem:[%s377] sm:$0x1] %vm385, 0.0
        %387 = vst.msk [vmem:[%s380] sm:$0x1] %vm385, 0.0
      $region52: #{forward.1} parent=47 // pred_fallthru
        _
      %v388 = vld [vmem:[%s3] sm:$0xff]
      %v389 = vld [vmem:[%s3 + $0x8] sm:$0xff]
      %v390 = vld [vmem:[%s3 + $0x10] sm:$0xff]
      %v391 = vld [vmem:[%s3 + $0x18] sm:$0xff]
      %v392 = vld [vmem:[%s364] sm:$0x77]
      %v393 = vld [vmem:[%s5] sm:$0xff]
      %v394 = vld [vmem:[%s5 + $0x8] sm:$0xff]
      %v395 = vld [vmem:[%s5 + $0x10] sm:$0xff]
      %v396 = vld [vmem:[%s5 + $0x18] sm:$0xff]
      %398 = vset.pattern.permute.xlu0 0
      %399 = vperm.xlu0 %398, %v393
      %v400 = vpop.permute.xlu0 %399
      %403 = vset.pattern.permute.xlu0 0
      %404 = vperm.xlu0 %403, %v394
      %v405 = vpop.permute.xlu0 %404
      %408 = vset.pattern.permute.xlu0 0
      %409 = vperm.xlu0 %408, %v395
      %v410 = vpop.permute.xlu0 %409
      %413 = vset.pattern.permute.xlu0 0
      %414 = vperm.xlu0 %413, %v396
      %v415 = vpop.permute.xlu0 %414
      %v418 = vcombine.high %v392, %v392
      %vm419 = vcmask 23552
      %v421 = vsel %vm419, %v388, 0
      %v424 = vsel %vm419, %v389, 0
      %v427 = vsel %vm419, %v390, 0
      %v430 = vsel %vm419, %v391, 0
      %vm432 = vcmask 1042432
      %v433 = vsel %vm432, %v392, 0
      %v435 = vsel %vm432, %v418, 0
      %437 = vmatprep.subr.mxu0 0.0
      %438 = vmatpush1.msra.mxu0 0.0
      %439 = vmatprep.subr.mxu0 0.0
      %440 = vmatpush1.msra.mxu0 0.0
      %441 = vmatprep.subr.mxu0 0.0
      %442 = vmatpush1.msra.mxu0 0.0
      %443 = vmatprep.subr.mxu0 0.0
      %444 = vmatpush1.msra.mxu0 0.0
      %445 = vmatprep.subr.mxu0 0.0
      %446 = vmatpush1.msra.mxu0 0.0
      %447 = vmatprep.subr.mxu0 0.0
      %448 = vmatpush1.msra.mxu0 0.0
      %449 = vmatprep.subr.mxu0 0.0
      %450 = vmatpush1.msra.mxu0 0.0
      %451 = vmatprep.subr.mxu0 0.0
      %452 = vmatpush1.msra.mxu0 0.0
      %453 = vmatprep.subr.mxu0 0.0
      %454 = vmatpush1.msra.mxu0 0.0
      %455 = vmatprep.subr.mxu0 0.0
      %456 = vmatpush1.msra.mxu0 0.0
      %457 = vmatprep.subr.mxu0 0.0
      %458 = vmatpush1.msra.mxu0 0.0
      %459 = vmatprep.subr.mxu0 0.0
      %460 = vmatpush1.msra.mxu0 0.0
      %461 = vmatprep.subr.mxu0 0.0
      %462 = vmatpush1.msra.mxu0 0.0
      %463 = vmatprep.subr.mxu0 0.0
      %464 = vmatpush1.msra.mxu0 0.0
      %465 = vmatprep.subr.mxu0 0.0
      %466 = vmatpush1.msra.mxu0 0.0
      %467 = vmatprep.subr.mxu0 %v435
      %468 = vmatpush1.msra.mxu0 %v433
      %469 = vmatprep.subr.mxu0 0.0
      %470 = vmatpush2.msra.mxu0 0.0
      %471 = vmatprep.subr.mxu0 0.0
      %472 = vmatpush2.msra.mxu0 0.0
      %473 = vmatprep.subr.mxu0 0.0
      %474 = vmatpush2.msra.mxu0 0.0
      %475 = vmatprep.subr.mxu0 0.0
      %476 = vmatpush2.msra.mxu0 0.0
      %477 = vmatprep.subr.mxu0 0.0
      %478 = vmatpush2.msra.mxu0 0.0
      %479 = vmatprep.subr.mxu0 0.0
      %480 = vmatpush2.msra.mxu0 0.0
      %481 = vmatprep.subr.mxu0 0.0
      %482 = vmatpush2.msra.mxu0 0.0
      %483 = vmatprep.subr.mxu0 0.0
      %484 = vmatpush2.msra.mxu0 0.0
      %485 = vmatprep.subr.mxu0 0.0
      %486 = vmatpush2.msra.mxu0 0.0
      %487 = vmatprep.subr.mxu0 0.0
      %488 = vmatpush2.msra.mxu0 0.0
      %489 = vmatprep.subr.mxu0 0.0
      %490 = vmatpush2.msra.mxu0 0.0
      %491 = vmatprep.subr.mxu0 0.0
      %492 = vmatpush2.msra.mxu0 0.0
      %493 = vmatprep.subr.mxu0 0.0
      %494 = vmatpush2.msra.mxu0 0.0
      %495 = vmatprep.subr.mxu0 0.0
      %496 = vmatpush2.msra.mxu0 0.0
      %497 = vmatprep.subr.mxu0 0.0
      %498 = vmatpush2.msra.mxu0 0.0
      %499 = vmatprep.subr.mxu0 0.0
      %500 = vmatpush2.msra.mxu0 0.0
      %501 = vmatprep.mubr.f32.mxu0 0.0
      %502 = vmatmul.mubr.f32.gmra.mxu0 %v421
      %v503 = vpop.f32.mrf.mxu0
      %v504 = vadd.f32 %v400, %v503
      %v505 = vpop.f32.mrf.mxu0
      %v506 = vadd.f32 %v400, %v505
      %507 = vmatprep.mubr.f32.mxu0 0.0
      %508 = vmatmul.mubr.f32.gmra.mxu0 %v424
      %v509 = vpop.f32.mrf.mxu0
      %v510 = vadd.f32 %v405, %v509
      %v511 = vpop.f32.mrf.mxu0
      %v512 = vadd.f32 %v405, %v511
      %513 = vmatprep.mubr.f32.mxu0 0.0
      %514 = vmatmul.mubr.f32.gmra.mxu0 %v427
      %v515 = vpop.f32.mrf.mxu0
      %v516 = vadd.f32 %v410, %v515
      %v517 = vpop.f32.mrf.mxu0
      %v518 = vadd.f32 %v410, %v517
      %519 = vmatprep.mubr.f32.mxu0 0.0
      %520 = vmatmul.mubr.f32.gmra.mxu0 %v430
      %v521 = vpop.f32.mrf.mxu0
      %v522 = vadd.f32 %v415, %v521
      %v523 = vpop.f32.mrf.mxu0
      %v524 = vadd.f32 %v415, %v523
      %525 = vdwg.mxu0
      %526 = vst [vmem:[#allocation2] sm:$0xff] %v504
      %527 = vst [vmem:[#allocation2 + $0x8] sm:$0xff] %v506
      %528 = vst [vmem:[#allocation2 + $0x10] sm:$0xff] %v510
      %529 = vst [vmem:[#allocation2 + $0x18] sm:$0xff] %v512
      %530 = vst [vmem:[#allocation2 + $0x20] sm:$0xff] %v516
      %531 = vst [vmem:[#allocation2 + $0x28] sm:$0xff] %v518
      %532 = vst [vmem:[#allocation2 + $0x30] sm:$0xff] %v522
      %533 = vst [vmem:[#allocation2 + $0x38] sm:$0xff] %v524
      %p534 = scmp.eq.s32.totalorder %s33, 0
      // Predicated region
      $region53: #{forward.1} parent=47 // pred_check
        %p535 = pneg %p534
      $region54: #{forward.1} parent=47 // pred_check_branch
        %537 = sbr.rel (%p535) target = $region56
      $region55: #{forward.1} parent=47 // pred_region
        %s538 = smul.u32 %s34, 256
        %v539 = vlaneseq
        %v540 = vand.u32 %v539, 127
        %v541 = vadd.s32 %v540, 128
        %v542 = vstv %s538
        %v543 = vadd.s32 %v542, %v540
        %v544 = vadd.s32 %v542, %v541
        %v545 = vshra.s32 %v543, 4
        %v546 = vshra.s32 %v544, 4
        %v547 = vand.u32 %v543, 15
        %v548 = vand.u32 %v544, 15
        %s549 = sld [smem:[#allocation4]]
        %v550 = vstv %s549
        %vm551 = vcmp.ge.s32.totalorder %v547, %v550
        %vm552 = vcmp.ge.s32.totalorder %v548, %v550
        %s553 = sld [smem:[#allocation4 + $0x2]]
        %v554 = vstv %s553
        %vm555 = vcmp.le.s32.totalorder %v547, %v554
        %vm556 = vcmp.le.s32.totalorder %v548, %v554
        %vm557 = vmand %vm551, %vm555
        %vm558 = vmand %vm552, %vm556
        %s559 = sld [smem:[#allocation4 + $0x1]]
        %v560 = vstv %s559
        %vm561 = vcmp.ge.s32.totalorder %v545, %v560
        %vm562 = vcmp.ge.s32.totalorder %v546, %v560
        %vm563 = vmand %vm557, %vm561
        %vm564 = vmand %vm558, %vm562
        %s565 = sld [smem:[#allocation4 + $0x3]]
        %v566 = vstv %s565
        %vm567 = vcmp.le.s32.totalorder %v545, %v566
        %vm568 = vcmp.le.s32.totalorder %v546, %v566
        %vm569 = vmand %vm563, %vm567
        %vm570 = vmand %vm564, %vm568
        %v571 = vld [vmem:[#allocation2] sm:$0xff]
        %v572 = vld [vmem:[#allocation2 + $0x8] sm:$0xff]
        %v573 = vld [vmem:[#allocation2 + $0x10] sm:$0xff]
        %v574 = vld [vmem:[#allocation2 + $0x18] sm:$0xff]
        %v575 = vld [vmem:[#allocation2 + $0x20] sm:$0xff]
        %v576 = vld [vmem:[#allocation2 + $0x28] sm:$0xff]
        %v577 = vld [vmem:[#allocation2 + $0x30] sm:$0xff]
        %v578 = vld [vmem:[#allocation2 + $0x38] sm:$0xff]
        %v579 = vld [vmem:[%s4] sm:$0xff]
        %v580 = vld [vmem:[%s4 + $0x8] sm:$0xff]
        %v581 = vld [vmem:[%s4 + $0x10] sm:$0xff]
        %v582 = vld [vmem:[%s4 + $0x18] sm:$0xff]
        %v583 = vsel %vm569, 1, 0
        %v584 = vsel %vm570, 1, 0
        %v585 = vcvt.s32.f32 %v583
        %v586 = vcvt.s32.f32 %v584
        %588 = vset.pattern.permute.xlu0 0
        %589 = vperm.xlu0 %588, %v579
        %v590 = vpop.permute.xlu0 %589
        %593 = vset.pattern.permute.xlu0 0
        %594 = vperm.xlu0 %593, %v580
        %v595 = vpop.permute.xlu0 %594
        %598 = vset.pattern.permute.xlu0 0
        %599 = vperm.xlu0 %598, %v581
        %v600 = vpop.permute.xlu0 %599
        %603 = vset.pattern.permute.xlu0 0
        %604 = vperm.xlu0 %603, %v582
        %v605 = vpop.permute.xlu0 %604
        %v607 = vmul.f32 %v590, %v585
        %v608 = vmul.f32 %v590, %v586
        %v609 = vmul.f32 %v595, %v585
        %v610 = vmul.f32 %v595, %v586
        %v611 = vmul.f32 %v600, %v585
        %v612 = vmul.f32 %v600, %v586
        %v613 = vmul.f32 %v605, %v585
        %v614 = vmul.f32 %v605, %v586
        %v615 = vadd.f32 %v571, %v607
        %v616 = vadd.f32 %v572, %v608
        %v617 = vadd.f32 %v573, %v609
        %v618 = vadd.f32 %v574, %v610
        %v619 = vadd.f32 %v575, %v611
        %v620 = vadd.f32 %v576, %v612
        %v621 = vadd.f32 %v577, %v613
        %v622 = vadd.f32 %v578, %v614
        %623 = vst [vmem:[#allocation2] sm:$0xff] %v615
        %624 = vst [vmem:[#allocation2 + $0x8] sm:$0xff] %v616
        %625 = vst [vmem:[#allocation2 + $0x10] sm:$0xff] %v617
        %626 = vst [vmem:[#allocation2 + $0x18] sm:$0xff] %v618
        %627 = vst [vmem:[#allocation2 + $0x20] sm:$0xff] %v619
        %628 = vst [vmem:[#allocation2 + $0x28] sm:$0xff] %v620
        %629 = vst [vmem:[#allocation2 + $0x30] sm:$0xff] %v621
        %630 = vst [vmem:[#allocation2 + $0x38] sm:$0xff] %v622
      $region56: #{forward.1} parent=47 // pred_fallthru
        _
      %v631 = vld [vmem:[#allocation2] sm:$0xff]
      %v632 = vld [vmem:[#allocation2 + $0x8] sm:$0xff]
      %v633 = vld [vmem:[#allocation2 + $0x10] sm:$0xff]
      %v634 = vld [vmem:[#allocation2 + $0x18] sm:$0xff]
      %v635 = vld [vmem:[#allocation2 + $0x20] sm:$0xff]
      %v636 = vld [vmem:[#allocation2 + $0x28] sm:$0xff]
      %v637 = vld [vmem:[#allocation2 + $0x30] sm:$0xff]
      %v638 = vld [vmem:[#allocation2 + $0x38] sm:$0xff]
      %v639 = vmax.f32 %v631, 0.0
      %v640 = vmax.f32 %v632, 0.0
      %v641 = vmax.f32 %v633, 0.0
      %v642 = vmax.f32 %v634, 0.0
      %v643 = vmax.f32 %v635, 0.0
      %v644 = vmax.f32 %v636, 0.0
      %v645 = vmax.f32 %v637, 0.0
      %v646 = vmax.f32 %v638, 0.0
      %v647 = vld [vmem:[%s6] sm:$0x1]
      %v648 = vld [vmem:[#allocation5] sm:$0x1]
      %650 = vset.pattern.permute.xlu0 0
      %651 = vperm.xlu0 %650, %v648
      %v652 = vpop.permute.xlu0 %651
      %v654 = vlaneseq
      %v655 = vshrl.u32 %v654, 7
      %v656 = vsub.s32 0, %v655
      %v657 = vrot.slane %v652, %v656
      %vm658 = vcmask 261120
      %v660 = vsel %vm658, %v647, 0
      %662 = vmatprep.subr.mxu0 0.0
      %663 = vmatpush1.msra.mxu0 0.0
      %664 = vmatprep.subr.mxu0 0.0
      %665 = vmatpush1.msra.mxu0 0.0
      %666 = vmatprep.subr.mxu0 0.0
      %667 = vmatpush1.msra.mxu0 0.0
      %668 = vmatprep.subr.mxu0 0.0
      %669 = vmatpush1.msra.mxu0 0.0
      %670 = vmatprep.subr.mxu0 0.0
      %671 = vmatpush1.msra.mxu0 0.0
      %672 = vmatprep.subr.mxu0 0.0
      %673 = vmatpush1.msra.mxu0 0.0
      %674 = vmatprep.subr.mxu0 0.0
      %675 = vmatpush1.msra.mxu0 0.0
      %676 = vmatprep.subr.mxu0 0.0
      %677 = vmatpush1.msra.mxu0 0.0
      %678 = vmatprep.subr.mxu0 0.0
      %679 = vmatpush1.msra.mxu0 0.0
      %680 = vmatprep.subr.mxu0 0.0
      %681 = vmatpush1.msra.mxu0 0.0
      %682 = vmatprep.subr.mxu0 0.0
      %683 = vmatpush1.msra.mxu0 0.0
      %684 = vmatprep.subr.mxu0 0.0
      %685 = vmatpush1.msra.mxu0 0.0
      %686 = vmatprep.subr.mxu0 %v646
      %687 = vmatpush1.msra.mxu0 %v645
      %688 = vmatprep.subr.mxu0 %v644
      %689 = vmatpush1.msra.mxu0 %v643
      %690 = vmatprep.subr.mxu0 %v642
      %691 = vmatpush1.msra.mxu0 %v641
      %692 = vmatprep.subr.mxu0 %v640
      %693 = vmatpush1.msra.mxu0 %v639
      %694 = vmatprep.subr.mxu0 0.0
      %695 = vmatpush2.msra.mxu0 0.0
      %696 = vmatprep.subr.mxu0 0.0
      %697 = vmatpush2.msra.mxu0 0.0
      %698 = vmatprep.subr.mxu0 0.0
      %699 = vmatpush2.msra.mxu0 0.0
      %700 = vmatprep.subr.mxu0 0.0
      %701 = vmatpush2.msra.mxu0 0.0
      %702 = vmatprep.subr.mxu0 0.0
      %703 = vmatpush2.msra.mxu0 0.0
      %704 = vmatprep.subr.mxu0 0.0
      %705 = vmatpush2.msra.mxu0 0.0
      %706 = vmatprep.subr.mxu0 0.0
      %707 = vmatpush2.msra.mxu0 0.0
      %708 = vmatprep.subr.mxu0 0.0
      %709 = vmatpush2.msra.mxu0 0.0
      %710 = vmatprep.subr.mxu0 0.0
      %711 = vmatpush2.msra.mxu0 0.0
      %712 = vmatprep.subr.mxu0 0.0
      %713 = vmatpush2.msra.mxu0 0.0
      %714 = vmatprep.subr.mxu0 0.0
      %715 = vmatpush2.msra.mxu0 0.0
      %716 = vmatprep.subr.mxu0 0.0
      %717 = vmatpush2.msra.mxu0 0.0
      %718 = vmatprep.subr.mxu0 0.0
      %719 = vmatpush2.msra.mxu0 0.0
      %720 = vmatprep.subr.mxu0 0.0
      %721 = vmatpush2.msra.mxu0 0.0
      %722 = vmatprep.subr.mxu0 0.0
      %723 = vmatpush2.msra.mxu0 0.0
      %724 = vmatprep.subr.mxu0 0.0
      %725 = vmatpush2.msra.mxu0 0.0
      %726 = vmatprep.mubr.f32.mxu0 0.0
      %727 = vmatmul.mubr.f32.gmra.mxu0 %v660
      %v728 = vpop.f32.mrf.mxu0
      %v729 = vadd.f32 %v657, %v728
      %v730 = vpop.f32.mrf.mxu0
      %v731 = vadd.f32 %v657, %v730
      %732 = vdwg.mxu0
      %vm733 = vcmp.ge.f32.partialorder %v729, 0.0
      %vm734 = vcmp.ge.f32.partialorder %v731, 0.0
      %v735 = vld [vmem:[%s373] sm:$0x3]
      %vm736 = vcmp.ge.f32.partialorder %v735, 0.5
      %v737 = vld [vmem:[%s377] sm:$0x1]
      %v738 = vsel %vm736, 1, 0
      %v739 = vlaneseq
      %v740 = vshrl.u32 %v739, 7
      %v741 = vsub.s32 0, %v740
      %v742 = vrot.slane %v738, %v741
      %v743 = vlaneseq
      %v744 = vshrl.u32 %v743, 7
      %v745 = vsub.s32 1, %v744
      %v746 = vrot.slane %v738, %v745
      %vm747 = vcmp.ne.s32.totalorder %v742, 0
      %vm748 = vcmp.ne.s32.totalorder %v746, 0
      %vm749 = vmand %vm733, %vm747
      %vm750 = vmand %vm734, %vm748
      %v751 = vsel %vm749, 1, 0
      %v752 = vsel %vm750, 1, 0
      %v753 = vcvt.s32.f32 %v751
      %v754 = vcvt.s32.f32 %v752
      %vm755 = vcmask 1040384
      %v756 = vsel %vm755, %v753, 0.0
      %v757 = vsel %vm755, %v754, 0.0
      %v758 = vadd.f32 %v756, %v757
      %759 = vadd.xlane.f32.xlu0 %v758
      %v760 = vpop.xlane.xlu0 %759
      %v761 = vrot.slane %v760, 4
      %v762 = vadd.f32 %v760, %v761
      %v763 = vrot.slane %v762, 2
      %v764 = vadd.f32 %v762, %v763
      %v765 = vrot.slane %v764, 1
      %v766 = vadd.f32 %v764, %v765
      %s767 = vtos %v766
      %v768 = vstv %s767
      %v769 = vadd.f32 %v737, %v768
      %vm770 = vcmask 0
      %771 = vst.msk [vmem:[%s377] sm:$0x1] %vm770, %v769
      %v772 = vld [vmem:[%s380] sm:$0x1]
      %vm773 = vmor %vm733, %vm747
      %vm774 = vmor %vm734, %vm748
      %v775 = vsel %vm773, 1, 0
      %v776 = vsel %vm774, 1, 0
      %v777 = vcvt.s32.f32 %v775
      %v778 = vcvt.s32.f32 %v776
      %v779 = vsel %vm755, %v777, 0.0
      %v780 = vsel %vm755, %v778, 0.0
      %v781 = vadd.f32 %v779, %v780
      %782 = vadd.xlane.f32.xlu0 %v781
      %v783 = vpop.xlane.xlu0 %782
      %v784 = vrot.slane %v783, 4
      %v785 = vadd.f32 %v783, %v784
      %v786 = vrot.slane %v785, 2
      %v787 = vadd.f32 %v785, %v786
      %v788 = vrot.slane %v787, 1
      %v789 = vadd.f32 %v787, %v788
      %s790 = vtos %v789
      %v791 = vstv %s790
      %v792 = vadd.f32 %v772, %v791
      %793 = vst.msk [vmem:[%s380] sm:$0x1] %vm770, %v792
      %p794 = scmp.lt.s32.totalorder %s33, 7
      %s795 = scalar_select %p794, %s33, 7
      %s796 = scalar_lea.vmem %s8, %s795
      %p797 = scmp.lt.s32.totalorder %s33, 7
      %s798 = scalar_select %p797, %s33, 7
      %s799 = scalar_lea.vmem %s9, %s798
      // Predicated region
      $region57: #{forward.1} parent=47 // pred_check
        %p800 = pneg %p220
      $region58: #{forward.1} parent=47 // pred_check_branch
        %802 = sbr.rel (%p800) target = $region60
      $region59: #{forward.1} parent=47 // pred_region
        _
      $region60: #{forward.1} parent=47 // pred_fallthru
        _
      // Predicated region
      $region61: #{forward.1} parent=47 // pred_check
        %p803 = pneg %p246
      $region62: #{forward.1} parent=47 // pred_check_branch
        %805 = sbr.rel (%p803) target = $region64
      $region63: #{forward.1} parent=47 // pred_region
        _
      $region64: #{forward.1} parent=47 // pred_fallthru
        _
    $region48: #{forward.1} parent=5 // pred_fallthru
      _
    %p806 = scmp.le.s32.totalorder 2, %s24
    // Predicated region
    $region65: #{forward.1} parent=5 // pred_check
      %p807 = pneg %p806
    $region66: #{forward.1} parent=5 // pred_check_branch
      %809 = sbr.rel (%p807) target = $region68
    $region67: #{forward.1} parent=5 // pred_region
      %s810 = ssub.s32 %s24, 2
      // Predicated region
      $region69: #{forward.1} parent=67 // pred_check
        %p811 = pneg %p226
      $region70: #{forward.1} parent=67 // pred_check_branch
        %813 = sbr.rel (%p811) target = $region72
      $region71: #{forward.1} parent=67 // pred_region
        %p814 = scmp.lt.s32.totalorder %s35, 7
        %s815 = scalar_select %p814, %s35, 7
        %s816 = scalar_lea.vmem %s8, %s815
      $region72: #{forward.1} parent=67 // pred_fallthru
        _
      // Predicated region
      $region73: #{forward.1} parent=67 // pred_check
        %p817 = pneg %p252
      $region74: #{forward.1} parent=67 // pred_check_branch
        %819 = sbr.rel (%p817) target = $region76
      $region75: #{forward.1} parent=67 // pred_region
        %p820 = scmp.lt.s32.totalorder %s35, 7
        %s821 = scalar_select %p820, %s35, 7
        %s822 = scalar_lea.vmem %s9, %s821
      $region76: #{forward.1} parent=67 // pred_fallthru
        _
    $region68: #{forward.1} parent=5 // pred_fallthru
      _
  $region6: #{forward.1} parent=0 // loop_footer
    %s28 = sadd.s32 1, %s24
  $region7: #{forward.1} parent=0 // loop_footer_branch
    %23 = sbr.rel target = $region3
  $region8: #{forward.1} parent=0 // loop_exit
    _

</llo_original>
